<compile_context>
chip_gen: v5e
topology: v5e:2x2
jax: 0.10.0
libtpu: 0.0.40
codegen_flags: <defaults>
</compile_context>

<pallas_src>
import functools
import math

import jax
import jax.numpy as jnp
from jax.experimental import pallas as pl
from jax.experimental.pallas import tpu as pltpu


def _build_pe_table(d_model: int, max_len: int, dtype=jnp.float32) -> jnp.ndarray:
    """Plain-JAX replica of the sin/cos buffer built in PositionalEncoding.__init__."""
    position = jnp.arange(max_len, dtype=jnp.float32)[:, None]            # [max_len, 1]
    div_term = jnp.exp(
        jnp.arange(0, d_model, 2, dtype=jnp.float32) * (-math.log(10000.0) / d_model)
    )                                                                      # [d_model//2]
    pe = jnp.zeros((max_len, 1, d_model), dtype=jnp.float32)
    pe = pe.at[:, 0, 0::2].set(jnp.sin(position * div_term))
    pe = pe.at[:, 0, 1::2].set(jnp.cos(position * div_term))
    return pe.astype(dtype)                     # cache pre-cast; wrapper only slices


def _choose_tile_rows(n_rows: int, row_bytes: int, sublane: int,
                      target_tile_bytes: int = 2 << 20) -> int:
    """Tile row count: ~2 MiB tiles, >=2 grid steps when possible (v7x megacore).

    2 MiB tiles sit at the measured HBM-roofline plateau for streaming adds while
    (x + out) x 2 pipeline buffers (~8 MiB) stays under the scoped-VMEM default on
    every generation (v5e 16 MiB, v6e/v7x 32 MiB).
    """
    ts = max(1, target_tile_bytes // max(row_bytes, 1))
    if n_rows >= 2 * sublane:
        ts = min(ts, n_rows // 2)               # guarantee >= 2 grid steps for 2 TCs
    ts = min(ts, n_rows)
    if ts < n_rows:
        ts = max(sublane, (ts // sublane) * sublane)
    return int(ts)


def _pe_dropout_kernel(seed_ref, x_ref, pe_ref, o_ref, *,
                       batch: int, collapsed: bool,
                       keep_threshold: int, scale: float,
                       apply_dropout: bool, use_hw_prng: bool):
    """One seq tile: o = dropout(x + pe).

    collapsed=True : x_ref/o_ref [TS, B*D], pe_ref [TS, D] (tiled over batch in-kernel).
    collapsed=False: x_ref/o_ref [TS, B, D], pe_ref [TS, 1, D] (sublane broadcast).
    seed_ref: int32[1] in SMEM (scalar prefetch).
    """
    pe = pe_ref[...]
    if collapsed and batch > 1:
        # Broadcast pe over batch in VMEM instead of paying S*B*D HBM reads.
        # Lane-axis concatenation (pe, pe, ..., pe) matches the row-major [B, D] order
        # of the collapsed x tile: out[t, b*D + d] = pe[t, d].
        pe = jnp.concatenate([pe] * batch, axis=-1)          # [TS, B*D]
    y = x_ref[...] + pe                                       # 3-D path: [TS,1,D] bcast

    if apply_dropout:
        if use_hw_prng:
            # Hardware PRNG: essentially free vs. HBM traffic; per-tile decorrelated
            # by folding the grid index into the seed.
            pltpu.prng_seed(seed_ref[0], pl.program_id(0))
            bits = pltpu.prng_random_bits(y.shape)
            if bits.dtype != jnp.uint32:
                bits = pltpu.bitcast(bits, jnp.uint32)
            u = bits
        else:
            # Portable counter-hash fallback (non-TPU / interpret runs only):
            # murmur3 fmix32 of (local flat index ^ per-tile seed).
            pid = pl.program_id(0).astype(jnp.uint32)
            seed = seed_ref[0].astype(jnp.uint32) ^ (pid * jnp.uint32(0x9E3779B9))
            idx = jax.lax.broadcasted_iota(jnp.int32, y.shape, 0)
            for ax in range(1, y.ndim):
                idx = idx * y.shape[ax] + jax.lax.broadcasted_iota(jnp.int32, y.shape, ax)
            u = idx.astype(jnp.uint32) ^ seed
            u = (u ^ (u >> 16)) * jnp.uint32(0x85EBCA6B)
            u = (u ^ (u >> 13)) * jnp.uint32(0xC2B2AE35)
            u = u ^ (u >> 16)

        # Unsigned threshold compare: P(drop) = p, P(keep) = 1 - p.  Single fused
        # scale multiply, no int->float convert, no zeros_like temporary.
        keep = u >= jnp.uint32(keep_threshold)
        y = jnp.where(keep, y * scale, 0.0)

    o_ref[...] = y.astype(o_ref.dtype)


def positional_encoding_forward(
    x: jnp.ndarray,
    pe_table: jnp.ndarray,
    *,
    dropout_p: float = 0.1,
    training: bool = True,
    seed: int = 0,
) -> jnp.ndarray:
    """Pallas implementation of PositionalEncoding.forward.

    x: [seq_len, batch, d_model]; pe_table: [max_len, 1, d_model] (pre-cast to x.dtype).
    `seed` should be threaded from the training step so masks differ per call.
    """
    S, B, D = x.shape
    pe = pe_table[:S]
    if pe.dtype != x.dtype:
        pe = pe.astype(x.dtype)                               # normally a no-op (pre-cast)

    apply_dropout = bool(training) and (0.0 < float(dropout_p) < 1.0)
    keep_threshold = (
        min(int(round(float(dropout_p) * 2.0 ** 32)), 0xFFFFFFFF) if apply_dropout else 0
    )
    scale = 1.0 / (1.0 - float(dropout_p)) if apply_dropout else 1.0
    use_hw_prng = apply_dropout and (jax.default_backend() == "tpu")
    seed_arr = jnp.asarray([seed], dtype=jnp.int32)

    itemsize = jnp.dtype(x.dtype).itemsize
    sublane = max(8, 32 // itemsize)                          # 8 f32, 16 bf16, 32 int8

    # 3-D layout only when D fills lanes AND batch fills the sublane axis; otherwise a
    # small B would pad every vreg/VMEM tile 4-8x and stride the DMA.
    use_3d = (D % 128 == 0) and (B % sublane == 0)

    if use_3d:
        row_bytes = B * D * itemsize
        ts = _choose_tile_rows(S, row_bytes, sublane)
        grid = (pl.cdiv(S, ts),)
        x_in, pe_in = x, pe                                   # pe stays [S, 1, D]
        in_specs = [
            pl.BlockSpec((ts, B, D), lambda i, s: (i, 0, 0)),
            pl.BlockSpec((ts, 1, D), lambda i, s: (i, 0, 0)),
        ]
        out_specs = pl.BlockSpec((ts, B, D), lambda i, s: (i, 0, 0))
        out_shape = jax.ShapeDtypeStruct((S, B, D), x.dtype)
        collapsed = False
    else:
        # Collapse [S,B,D] -> [S, B*D]: lane-dense loads/stores, fully packed sublanes.
        # pe is passed un-broadcast as [S, D]; the kernel tiles it over batch in VMEM.
        W = B * D
        row_bytes = W * itemsize
        ts = _choose_tile_rows(S, row_bytes, sublane)
        grid = (pl.cdiv(S, ts),)
        x_in = x.reshape(S, W)                                # free row-major view
        pe_in = pe.reshape(S, D)                              # squeeze the size-1 dim
        in_specs = [
            pl.BlockSpec((ts, W), lambda i, s: (i, 0)),
            pl.BlockSpec((ts, D), lambda i, s: (i, 0)),
        ]
        out_specs = pl.BlockSpec((ts, W), lambda i, s: (i, 0))
        out_shape = jax.ShapeDtypeStruct((S, W), x.dtype)
        collapsed = True

    kernel = functools.partial(
        _pe_dropout_kernel,
        batch=B,
        collapsed=collapsed,
        keep_threshold=keep_threshold,
        scale=scale,
        apply_dropout=apply_dropout,
        use_hw_prng=use_hw_prng,
    )

    grid_spec = pltpu.PrefetchScalarGridSpec(
        num_scalar_prefetch=1,                                # seed lands in SMEM
        grid=grid,
        in_specs=in_specs,
        out_specs=out_specs,
    )

    out = pl.pallas_call(
        kernel,
        out_shape=out_shape,
        grid_spec=grid_spec,
        compiler_params=pltpu.CompilerParams(
            # Each seq tile is independent (pure elementwise): let v7x's two TensorCores
            # split the grid. Harmless on single-TC v5e/v6e.
            dimension_semantics=("parallel",),
        ),
        # NOTE: no input_output_aliases — under PrefetchScalarGridSpec the operand index
        # of x is ambiguous w.r.t. the prefetch seed; silently aliasing pe would be worse
        # than paying the extra output write.
    )(seed_arr, x_in, pe_in)

    return out.reshape(S, B, D)


if __name__ == "__main__":
    # Small shapes consistent with the module's [seq_len, batch, d_model] input.
    seq_len, batch, d_model = 8, 2, 32
    max_len = 64
    p = 0.1

    key = jax.random.PRNGKey(0)
    x = jax.random.normal(key, (seq_len, batch, d_model), dtype=jnp.float32)
    pe_table = _build_pe_table(d_model, max_len, dtype=x.dtype)   # built & cast once

    # Training mode: dropout active (hardware PRNG on TPU backend).
    out = positional_encoding_forward(x, pe_table, dropout_p=p, training=True, seed=0)
    out = jax.block_until_ready(out)
    assert out.shape == (seq_len, batch, d_model)

    # Eval mode must match the pure-JAX reference exactly.
    out_eval = positional_encoding_forward(x, pe_table, dropout_p=p, training=False)
    out_eval = jax.block_until_ready(out_eval)
    ref_eval = x + pe_table[:seq_len]
    assert jnp.allclose(out_eval, ref_eval, atol=1e-6), "eval-mode mismatch"

    # Dropout sanity: every output element is either 0 or (x+pe)/(1-p), and the dropped
    # fraction is in a loose (~6 sigma) band around p.
    y_scaled = ref_eval / (1.0 - p)
    valid = jnp.isclose(out, 0.0) | jnp.isclose(out, y_scaled, atol=1e-5)
    assert bool(jnp.all(valid)), "dropout values not in {0, scaled(x+pe)}"
    frac_dropped = float(jnp.mean((out == 0.0).astype(jnp.float32)))
    assert 0.01 <= frac_dropped <= 0.30, f"unexpected drop fraction {frac_dropped}"

    print("KERNEL_OK")
</pallas_src>

<mosaic_0001>
module attributes {stable_mosaic.version = 11 : i64} {
  func.func @_pe_dropout_kernel(%arg0: i32, %arg1: memref<1xi32, #tpu.memory_space<smem>>, %arg2: memref<8x64xf32, #tpu.memory_space<vmem>>, %arg3: memref<8x32xf32, #tpu.memory_space<vmem>>, %arg4: memref<8x64xf32, #tpu.memory_space<vmem>>) attributes {dimension_semantics = [#tpu.dimension_semantics<parallel>], iteration_bounds = array<i64: 1>, scalar_prefetch = 1 : i64, scratch_operands = 0 : i64, tpu.core_type = #tpu.core_type<tc>, window_params = [{transform_indices = @transform_0, window_bounds = array<i64: 8, 64>}, {transform_indices = @transform_1, window_bounds = array<i64: 8, 32>}, {transform_indices = @transform_2, window_bounds = array<i64: 8, 64>}]} {
    %c0 = arith.constant 0 : index
    %c0_0 = arith.constant 0 : index
    %0 = vector.load %arg3[%c0, %c0_0] : memref<8x32xf32, #tpu.memory_space<vmem>>, vector<8x32xf32>
    %1 = tpu.concatenate %0, %0 in 1 : vector<8x32xf32>, vector<8x32xf32> -> vector<8x64xf32>
    %c0_1 = arith.constant 0 : index
    %c0_2 = arith.constant 0 : index
    %2 = vector.load %arg2[%c0_1, %c0_2] : memref<8x64xf32, #tpu.memory_space<vmem>>, vector<8x64xf32>
    %3 = arith.addf %2, %1 : vector<8x64xf32>
    %c0_3 = arith.constant 0 : index
    %4 = memref.load %arg1[%c0_3] : memref<1xi32, #tpu.memory_space<smem>>
    %c-1640531527_i32 = arith.constant -1640531527 : i32
    %5 = arith.muli %arg0, %c-1640531527_i32 : i32
    %6 = arith.xori %4, %5 : i32
    %7 = tpu.iota {dimensions = array<i32: 0>} : vector<8x64xi32>
    %c64_i32 = arith.constant 64 : i32
    %8 = vector.broadcast %c64_i32 : i32 to vector<8x64xi32>
    %9 = arith.muli %7, %8 : vector<8x64xi32>
    %10 = tpu.iota {dimensions = array<i32: 1>} : vector<8x64xi32>
    %11 = arith.addi %9, %10 : vector<8x64xi32>
    %12 = vector.broadcast %6 : i32 to vector<8x64xi32>
    %13 = arith.xori %11, %12 : vector<8x64xi32>
    %c16_i32 = arith.constant 16 : i32
    %14 = vector.broadcast %c16_i32 : i32 to vector<8x64xi32>
    %15 = arith.shrui %13, %14 : vector<8x64xi32>
    %16 = arith.xori %13, %15 : vector<8x64xi32>
    %c-2048144789_i32 = arith.constant -2048144789 : i32
    %17 = vector.broadcast %c-2048144789_i32 : i32 to vector<8x64xi32>
    %18 = arith.muli %16, %17 : vector<8x64xi32>
    %c13_i32 = arith.constant 13 : i32
    %19 = vector.broadcast %c13_i32 : i32 to vector<8x64xi32>
    %20 = arith.shrui %18, %19 : vector<8x64xi32>
    %21 = arith.xori %18, %20 : vector<8x64xi32>
    %c-1028477387_i32 = arith.constant -1028477387 : i32
    %22 = vector.broadcast %c-1028477387_i32 : i32 to vector<8x64xi32>
    %23 = arith.muli %21, %22 : vector<8x64xi32>
    %c16_i32_4 = arith.constant 16 : i32
    %24 = vector.broadcast %c16_i32_4 : i32 to vector<8x64xi32>
    %25 = arith.shrui %23, %24 : vector<8x64xi32>
    %26 = arith.xori %23, %25 : vector<8x64xi32>
    %c429496730_i32 = arith.constant 429496730 : i32
    %27 = vector.broadcast %c429496730_i32 : i32 to vector<8x64xi32>
    %28 = arith.cmpi uge, %26, %27 : vector<8x64xi32>
    %cst = arith.constant 1.11111116 : f32
    %29 = vector.broadcast %cst : f32 to vector<8x64xf32>
    %30 = arith.mulf %3, %29 : vector<8x64xf32>
    %cst_5 = arith.constant 0.000000e+00 : f32
    %31 = vector.broadcast %cst_5 : f32 to vector<8x64xf32>
    %32 = arith.select %28, %30, %31 : vector<8x64xi1>, vector<8x64xf32>
    %c0_6 = arith.constant 0 : index
    %c0_7 = arith.constant 0 : index
    %33 = vector.load %arg4[%c0_6, %c0_7] : memref<8x64xf32, #tpu.memory_space<vmem>>, vector<8x64xf32>
    tpu.vector_store %arg4[%c0_6, %c0_7], %32 {strides = array<i32>} : memref<8x64xf32, #tpu.memory_space<vmem>>, vector<8x64xf32>,
    return
  }
  func.func @transform_0(%arg0: i32, %arg1: memref<1xi32, #tpu.memory_space<smem>>) -> (i32, i32) {
    %c0_i32 = arith.constant 0 : i32
    %c0_i32_0 = arith.constant 0 : i32
    return %arg0, %c0_i32 : i32, i32
  }
  func.func @transform_1(%arg0: i32, %arg1: memref<1xi32, #tpu.memory_space<smem>>) -> (i32, i32) {
    %c0_i32 = arith.constant 0 : i32
    %c0_i32_0 = arith.constant 0 : i32
    return %arg0, %c0_i32 : i32, i32
  }
  func.func @transform_2(%arg0: i32, %arg1: memref<1xi32, #tpu.memory_space<smem>>) -> (i32, i32) {
    %c0_i32 = arith.constant 0 : i32
    %c0_i32_0 = arith.constant 0 : i32
    return %arg0, %c0_i32 : i32, i32
  }
}

</mosaic_0001>

<llo_original>
// kernel: tpu_custom_call.1
$region0: #{tpu_custom_call.1}
  #allocation0 [shape = 'u32[]', space=smem, size = 0x4, offset = 0x4, fixed_abs, tag = 'smem constant byte address 0x4 - core index']
  #allocation1 [shape = 'u32[72,128]{1,0:T(1,128)}', space=vmem, size = 0x9000, scoped, tag = 'internal scratch']
  #allocation2 [shape = 's32[1]{0}', space=sflag, size = 0x4, scoped, tag = 'scoped memory for tpu_custom_call.1']
  #allocation3 [shape = 's32[1]{0:T(128)S(6)}', space=smem, size = 0x200, scoped, tag = 'prefetched SMEM operand 0']
  %s0 = inlined_call_operand.<no memory space> [shape: s32[1], index: 0, kind: input, shape index: {}]
  %s1 = inlined_call_operand.hbm [shape: f32[8,64], index: 1, kind: input, shape index: {}]
  %s2 = inlined_call_operand.hbm [shape: f32[8,32], index: 2, kind: input, shape index: {}]
  %s3 = inlined_call_operand.hbm [shape: f32[8,64], index: 3, kind: output, shape index: {}]
  %s4 = sld [smem:[#allocation0]]
  $region26: #{tpu_custom_call.1} parent=0
    _
  %s6 = ssub.s32 1, %s4
  %s7 = scalar_select 0, %s6, %s4
  %8 = sst [smem:[#allocation3]] %s0
  $region1: #{tpu_custom_call.1} parent=0
    #allocation4 [shape = 'u8[4096]{0}', space=vmem, size = 0x1000, scoped, tag = 'input window, operand 1, single buffered']
    #allocation5 [shape = 's32[1]{0}', space=sflag, size = 0x4, scoped, tag = 'scoped memory for tpu_custom_call.1']
    #allocation6 [shape = 's32[1]{0}', space=sflag, size = 0x4, scoped, tag = 'scoped memory for tpu_custom_call.1']
    #allocation7 [shape = 'u8[4096]{0}', space=vmem, size = 0x1000, scoped, tag = 'input window, operand 2, single buffered']
    #allocation8 [shape = 's32[1]{0}', space=sflag, size = 0x4, scoped, tag = 'scoped memory for tpu_custom_call.1']
    #allocation9 [shape = 'u8[4096]{0}', space=vmem, size = 0x1000, scoped, tag = 'output window, operand 0, single buffered']
    %9 = vsyncpa [#allocation5], 0
    %10 = vsyncpa [#allocation8], 0
    %11 = vsyncpa [#allocation6], 0
    // Predicated region
    $region2: #{tpu_custom_call.1} parent=1 // pred_check
      _
    $region3: #{tpu_custom_call.1} parent=1 // pred_check_branch
      %13 = sbr.rel (0) target = $region5
    $region4: #{tpu_custom_call.1} parent=1 // pred_region
      %15 = vsyncadd [#allocation5], 0
      %s17 = sshll.u32 %s1, 4
      %s18 = int_to_ptr.hbm [resolvable:$true] %s17
      %s19 = sshll.u32 [#allocation4], 4
      %s20 = int_to_ptr.vmem [resolvable:$true] %s19
      %22 = dma.hbm_to_vmem [thread:$0]  %s18, 128, %s20, [#allocation5]
    $region5: #{tpu_custom_call.1} parent=1 // pred_fallthru
      _
    // Predicated region
    $region6: #{tpu_custom_call.1} parent=1 // pred_check
      _
    $region7: #{tpu_custom_call.1} parent=1 // pred_check_branch
      %24 = sbr.rel (0) target = $region9
    $region8: #{tpu_custom_call.1} parent=1 // pred_region
      %26 = vsyncadd [#allocation8], 0
      %s28 = sshll.u32 %s2, 4
      %s29 = int_to_ptr.hbm [resolvable:$true] %s28
      %s30 = sshll.u32 [#allocation7], 4
      %s31 = int_to_ptr.vmem [resolvable:$true] %s30
      %33 = dma.hbm_to_vmem [thread:$0]  %s29, 128, %s31, [#allocation8]
    $region9: #{tpu_custom_call.1} parent=1 // pred_fallthru
      _
    // Predicated region
    $region10: #{tpu_custom_call.1} parent=1 // pred_check
      _
    $region11: #{tpu_custom_call.1} parent=1 // pred_check_branch
      %35 = sbr.rel (0) target = $region13
    $region12: #{tpu_custom_call.1} parent=1 // pred_region
      %37 = dma.done [#allocation5], 128
    $region13: #{tpu_custom_call.1} parent=1 // pred_fallthru
      _
    // Predicated region
    $region14: #{tpu_custom_call.1} parent=1 // pred_check
      _
    $region15: #{tpu_custom_call.1} parent=1 // pred_check_branch
      %39 = sbr.rel (0) target = $region17
    $region16: #{tpu_custom_call.1} parent=1 // pred_region
      %41 = dma.done [#allocation8], 128
    $region17: #{tpu_custom_call.1} parent=1 // pred_fallthru
      _
    %v42 = vld [vmem:[#allocation7] sm:$0xff]
    %44 = vrot.lane.b32.xlu0 %v42, 32
    %v45 = vpop.permute.xlu0 %44
    %vm47 = vcmask 261120
    %v48 = vsel %vm47, %v42, %v45
    %v49 = vld [vmem:[#allocation4] sm:$0xff]
    %v50 = vadd.f32 %v49, %v48
    %s51 = sld [smem:[#allocation3]]
    %s52 = smul.u32 0, 2654435769
    %s53 = sxor.u32 %s51, %s52
    %v54 = vlaneseq
    %v55 = vshrl.u32 %v54, 7
    %v56 = vmul.u32 %v55, 64
    %v57 = vlaneseq
    %v58 = vand.u32 %v57, 127
    %v59 = vadd.s32 %v56, %v58
    %v60 = vstv %s53
    %v61 = vxor.u32 %v59, %v60
    %v62 = vshrl.u32 %v61, 16
    %v63 = vxor.u32 %v61, %v62
    %v64 = vmul.u32 %v63, 2246822507
    %v65 = vshrl.u32 %v64, 13
    %v66 = vxor.u32 %v64, %v65
    %v67 = vmul.u32 %v66, 3266489909
    %v68 = vshrl.u32 %v67, 16
    %v69 = vxor.u32 %v67, %v68
    %v70 = vadd.s32 %v69, 2147483648
    %vm72 = vcmp.ge.s32.totalorder %v70, 2576980378
    %v73 = vmul.f32 %v50, 1.1111112
    %v74 = vsel %vm72, %v73, 0.0
    %vm75 = vcmask 523264
    %76 = vst.msk [vmem:[#allocation9] sm:$0xff] %vm75, %v74
    // Predicated region
    $region18: #{tpu_custom_call.1} parent=1 // pred_check
      _
    $region19: #{tpu_custom_call.1} parent=1 // pred_check_branch
      %78 = sbr.rel (0) target = $region21
    $region20: #{tpu_custom_call.1} parent=1 // pred_region
      %80 = vsyncadd [#allocation6], 0
      %s82 = sshll.u32 [#allocation9], 4
      %s83 = int_to_ptr.vmem [resolvable:$true] %s82
      %s84 = sshll.u32 %s3, 4
      %s85 = int_to_ptr.hbm [resolvable:$true] %s84
      %87 = dma.vmem_to_hbm [thread:$0]  %s83, 128, %s85, [#allocation6]
    $region21: #{tpu_custom_call.1} parent=1 // pred_fallthru
      _
    // Predicated region
    $region22: #{tpu_custom_call.1} parent=1 // pred_check
      _
    $region23: #{tpu_custom_call.1} parent=1 // pred_check_branch
      %89 = sbr.rel (0) target = $region25
    $region24: #{tpu_custom_call.1} parent=1 // pred_region
      %91 = dma.done [#allocation6], 128
    $region25: #{tpu_custom_call.1} parent=1 // pred_fallthru
      _
    %92 = vsyncpa [#allocation5], 1
    %93 = vsyncpa [#allocation8], 1
    %94 = vsyncpa [#allocation6], 1

</llo_original>
